<compile_context>
chip_gen: v7x
topology: tpu7x:2x2x1
jax: 0.10.0
libtpu: 0.0.40
codegen_flags: <defaults>
</compile_context>

<pallas_src>
import jax
import jax.numpy as jnp
from jax.experimental import pallas as pl
from jax.experimental.pallas import tpu as pltpu

_LANE = 128


def _layernorm_kernel(x_ref, g_ref, o_ref):
    # x_ref: (TB, C, tHW) block ; g_ref: (C, 1) float32 ; o_ref: (TB, C, tHW)
    # eps follows the PyTorch module: picked off the *input* dtype.
    eps = 1e-5 if x_ref.dtype == jnp.float32 else 1e-3
    x = x_ref[...].astype(jnp.float32)                 # stats in f32 always
    mean = jnp.mean(x, axis=1, keepdims=True)          # (TB, 1, tHW)
    xc = x - mean                                      # bind once, reuse
    var = jnp.mean(xc * xc, axis=1, keepdims=True)     # biased (unbiased=False)
    inv = jax.lax.rsqrt(var + eps)
    o_ref[...] = (xc * inv * g_ref[...]).astype(o_ref.dtype)   # g already f32


def _choose_tiles(N, C, HW, itemsize):
    """Pick (TB, tHW, C_pad): images-per-block, lane tile, padded sublane extent."""
    # Dtype-aware sublane padding: (8,128) f32, (16,128) bf16, (32,128) int8/fp8.
    sub = max(8, 32 // itemsize)
    c_pad = -(-C // sub) * sub
    # Per-*input*-block budget. Pipeline holds ~4x this (double-buffered in+out)
    # plus f32 intermediates; keep it so the total fits v7x's 64 MiB VMEM with
    # headroom while making per-step DMA >> the ~0.35 us fixed step overhead.
    budget = (6 if itemsize >= 4 else 4) * 1024 * 1024
    # Lane tile: multiple of 128, capped at 8192 and by the VMEM budget.
    # (If C is so large that even 128 lanes overshoot the budget, we still use
    #  128 and derive vmem_limit_bytes from the *actual* block size below.)
    max_lanes = (budget // (c_pad * itemsize)) // _LANE * _LANE
    hw_128 = -(-HW // _LANE) * _LANE
    thw = max(_LANE, min(hw_128, 8192, max_lanes))
    n_j = -(-HW // thw)                                 # trailing tile may be partial
    # Batch images per block while they fit the budget (TB divides N) and the
    # grid keeps >= 4 steps (so v7x's 2 TCs can both be fed via "parallel" axes).
    tb = 1
    while (N % (tb * 2) == 0
           and (tb * 2) * c_pad * thw * itemsize <= budget
           and (N // (tb * 2)) * n_j >= 4):
        tb *= 2
    return tb, thw, c_pad


def layer_norm(x, g):
    """Channel LayerNorm matching the PyTorch module.

    x: (N, C, H, W)   g: (1, C, 1, 1)
    Returns (N, C, H, W), normalized over dim=1 with unbiased=False variance.
    """
    N, C, H, W = x.shape
    HW = H * W
    itemsize = jnp.dtype(x.dtype).itemsize
    tb, thw, c_pad = _choose_tiles(N, C, HW, itemsize)

    x2 = x.reshape(N, C, HW)
    g2 = g.reshape(C, 1).astype(jnp.float32)            # keep gain in f32

    grid = (N // tb, pl.cdiv(HW, thw))

    # Derive the VMEM limit from the actual (padded) block footprint:
    # 2x double-buffered input + 2x double-buffered output + f32 intermediates
    # inside the body + headroom. Floor at 32 MiB.
    block_bytes = tb * c_pad * thw * itemsize
    f32_block_bytes = tb * c_pad * thw * 4
    vmem_limit = max(32 * 1024 * 1024,
                     4 * block_bytes + 2 * f32_block_bytes + 2 * 1024 * 1024)

    out = pl.pallas_call(
        _layernorm_kernel,
        out_shape=jax.ShapeDtypeStruct((N, C, HW), x.dtype),
        grid_spec=pltpu.PrefetchScalarGridSpec(
            num_scalar_prefetch=0,
            grid=grid,
            in_specs=[
                pl.BlockSpec((tb, C, thw), lambda i, j: (i, 0, j)),
                pl.BlockSpec((C, 1), lambda i, j: (0, 0)),
            ],
            out_specs=pl.BlockSpec((tb, C, thw), lambda i, j: (i, 0, j)),
        ),
        compiler_params=pltpu.CompilerParams(
            # Both axes are independent -> let v7x's two TCs shard either one.
            dimension_semantics=("parallel", "parallel"),
            vmem_limit_bytes=int(vmem_limit),
        ),
    )(x2, g2)

    return out.reshape(N, C, H, W)


def pre_norm(x, g, fn):
    """PreNorm.forward: fn(LayerNorm(x))."""
    # TODO(synk): PreNorm.fn is an arbitrary wrapped module; for real workloads
    # fuse this channel-norm into the consumer kernel's input tile (or the
    # producer's epilogue) to remove this kernel's full read+write HBM pass.
    return fn(layer_norm(x, g))


def layer_norm_ref(x, g):
    eps = 1e-5 if x.dtype == jnp.float32 else 1e-3
    x32 = x.astype(jnp.float32)
    mean = jnp.mean(x32, axis=1, keepdims=True)
    var = jnp.mean((x32 - mean) ** 2, axis=1, keepdims=True)
    out = (x32 - mean) * jax.lax.rsqrt(var + eps) * g.astype(jnp.float32)
    return out.astype(x.dtype)


if __name__ == "__main__":
    key = jax.random.PRNGKey(0)

    # Shapes implied by the module: NCHW with per-channel gain g = ones(1,C,1,1).
    N, C, H, W = 2, 4, 16, 16
    x = jax.random.normal(key, (N, C, H, W), dtype=jnp.float32)
    g = jnp.ones((1, C, 1, 1), dtype=jnp.float32)

    out = pre_norm(x, g, lambda y: y)   # identity fn -> output is the norm itself
    out = jax.block_until_ready(out)
    ref = layer_norm_ref(x, g)
    assert out.shape == (N, C, H, W)
    assert jnp.allclose(out, ref, atol=1e-5, rtol=1e-5)

    # Exercise the partial trailing lane-tile path (HW not a multiple of 128),
    # now handled by Pallas masking instead of a wrapper-side pad + slice.
    key2 = jax.random.PRNGKey(1)
    x2 = jax.random.normal(key2, (3, 4, 10, 10), dtype=jnp.float32)
    g2 = jnp.ones((1, 4, 1, 1), dtype=jnp.float32)
    out2 = jax.block_until_ready(layer_norm(x2, g2))
    ref2 = layer_norm_ref(x2, g2)
    assert out2.shape == x2.shape
    assert jnp.allclose(out2, ref2, atol=1e-5, rtol=1e-5)

    # Exercise the bf16 path (eps=1e-3, f32 stats, f32-resident gain,
    # dtype-aware sublane budget).
    key3 = jax.random.PRNGKey(2)
    x3 = jax.random.normal(key3, (2, 4, 16, 16), dtype=jnp.bfloat16)
    g3 = jnp.ones((1, 4, 1, 1), dtype=jnp.float32)
    out3 = jax.block_until_ready(layer_norm(x3, g3))
    ref3 = layer_norm_ref(x3, g3)
    assert out3.shape == x3.shape
    assert jnp.allclose(out3.astype(jnp.float32), ref3.astype(jnp.float32),
                        atol=2e-2, rtol=2e-2)

    print("KERNEL_OK")
</pallas_src>

<mosaic_0001>
module attributes {stable_mosaic.version = 11 : i64} {
  func.func @_layernorm_kernel(%arg0: i32, %arg1: i32, %arg2: memref<1x4x256xf32, #tpu.memory_space<vmem>>, %arg3: memref<4x1xf32, #tpu.memory_space<vmem>>, %arg4: memref<1x4x256xf32, #tpu.memory_space<vmem>>) attributes {dimension_semantics = [#tpu.dimension_semantics<parallel>, #tpu.dimension_semantics<parallel>], iteration_bounds = array<i64: 2, 1>, scalar_prefetch = 0 : i64, scratch_operands = 0 : i64, tpu.core_type = #tpu.core_type<tc>, window_params = [{transform_indices = @transform_0, window_bounds = array<i64: 1, 4, 256>}, {pipeline_mode = #tpu.pipeline_mode<synchronous>, transform_indices = @transform_1, window_bounds = array<i64: 4, 1>}, {transform_indices = @transform_2, window_bounds = array<i64: 1, 4, 256>}]} {
    %c0 = arith.constant 0 : index
    %c0_0 = arith.constant 0 : index
    %c0_1 = arith.constant 0 : index
    %0 = vector.load %arg2[%c0, %c0_0, %c0_1] : memref<1x4x256xf32, #tpu.memory_space<vmem>>, vector<1x4x256xf32>
    %cst = arith.constant dense<0.000000e+00> : vector<1x256xf32>
    %1 = vector.multi_reduction <add>, %0, %cst [1] : vector<1x4x256xf32> to vector<1x256xf32>
    %2 = vector.shape_cast %1 : vector<1x256xf32> to vector<1x1x256xf32>
    %cst_2 = arith.constant 4.000000e+00 : f32
    %3 = vector.broadcast %cst_2 : f32 to vector<1x1x256xf32>
    %4 = arith.divf %2, %3 : vector<1x1x256xf32>
    %5 = vector.broadcast %4 : vector<1x1x256xf32> to vector<1x4x256xf32>
    %6 = arith.subf %0, %5 : vector<1x4x256xf32>
    %7 = arith.mulf %6, %6 : vector<1x4x256xf32>
    %cst_3 = arith.constant dense<0.000000e+00> : vector<1x256xf32>
    %8 = vector.multi_reduction <add>, %7, %cst_3 [1] : vector<1x4x256xf32> to vector<1x256xf32>
    %9 = vector.shape_cast %8 : vector<1x256xf32> to vector<1x1x256xf32>
    %cst_4 = arith.constant 4.000000e+00 : f32
    %10 = vector.broadcast %cst_4 : f32 to vector<1x1x256xf32>
    %11 = arith.divf %9, %10 : vector<1x1x256xf32>
    %cst_5 = arith.constant 9.99999974E-6 : f32
    %12 = vector.broadcast %cst_5 : f32 to vector<1x1x256xf32>
    %13 = arith.addf %11, %12 : vector<1x1x256xf32>
    %14 = math.rsqrt %13 : vector<1x1x256xf32>
    %15 = vector.broadcast %14 : vector<1x1x256xf32> to vector<1x4x256xf32>
    %16 = arith.mulf %6, %15 : vector<1x4x256xf32>
    %c0_6 = arith.constant 0 : index
    %c0_7 = arith.constant 0 : index
    %17 = vector.load %arg3[%c0_6, %c0_7] : memref<4x1xf32, #tpu.memory_space<vmem>>, vector<4x1xf32>
    %18 = vector.shape_cast %17 : vector<4x1xf32> to vector<1x4x1xf32>
    %19 = vector.broadcast %18 : vector<1x4x1xf32> to vector<1x4x256xf32>
    %20 = arith.mulf %16, %19 : vector<1x4x256xf32>
    %c0_8 = arith.constant 0 : index
    %c0_9 = arith.constant 0 : index
    %c0_10 = arith.constant 0 : index
    %21 = vector.load %arg4[%c0_8, %c0_9, %c0_10] : memref<1x4x256xf32, #tpu.memory_space<vmem>>, vector<1x4x256xf32>
    tpu.vector_store %arg4[%c0_8, %c0_9, %c0_10], %20 {strides = array<i32>} : memref<1x4x256xf32, #tpu.memory_space<vmem>>, vector<1x4x256xf32>,
    return
  }
  func.func @transform_0(%arg0: i32, %arg1: i32) -> (i32, i32, i32) {
    %c0_i32 = arith.constant 0 : i32
    %c0_i32_0 = arith.constant 0 : i32
    return %arg0, %c0_i32, %arg1 : i32, i32, i32
  }
  func.func @transform_1(%arg0: i32, %arg1: i32) -> (i32, i32) {
    %c0_i32 = arith.constant 0 : i32
    %c0_i32_0 = arith.constant 0 : i32
    %c0_i32_1 = arith.constant 0 : i32
    return %c0_i32, %c0_i32_0 : i32, i32
  }
  func.func @transform_2(%arg0: i32, %arg1: i32) -> (i32, i32, i32) {
    %c0_i32 = arith.constant 0 : i32
    %c0_i32_0 = arith.constant 0 : i32
    return %arg0, %c0_i32, %arg1 : i32, i32, i32
  }
}

</mosaic_0001>

<llo_original>
// kernel: tpu_custom_call.1
$region0: #{tpu_custom_call.1}
  #allocation0 [shape = 'u32[]', space=smem, size = 0x4, offset = 0x4, fixed_abs, tag = 'smem constant byte address 0x4 - core index']
  #allocation1 [shape = 'u32[144,128]{1,0:T(1,128)}', space=vmem, size = 0x12000, scoped, tag = 'internal scratch']
  %s0 = inlined_call_operand.hbm [shape: f32[2,4,256], index: 0, kind: input, shape index: {}]
  %s1 = inlined_call_operand.vmem [shape: f32[4,1], index: 1, kind: input, shape index: {}]
  %s2 = inlined_call_operand.hbm [shape: f32[2,4,256], index: 2, kind: output, shape index: {}]
  %s3 = sld [smem:[#allocation0]]
  $region45: #{tpu_custom_call.1} parent=0
    _
  %s5 = ssub.s32 1, %s3
  %s6 = scalar_select 0, %s5, %s3
  $region1: #{tpu_custom_call.1} parent=0
    #allocation2 [shape = 'u8[8192]{0}', space=vmem, size = 0x2000, scoped, tag = 'input window, operand 0']
    #allocation3 [shape = 's32[2]{0}', space=sflag, size = 0x8, scoped, tag = 'scoped memory for tpu_custom_call.1']
    #allocation4 [shape = 's32[2]{0}', space=sflag, size = 0x8, scoped, tag = 'scoped memory for tpu_custom_call.1']
    #allocation5 [shape = 'u8[8192]{0}', space=vmem, size = 0x2000, scoped, tag = 'output window, operand 0']
    %7 = vsyncpa [#allocation3], 0
    %s8 = scalar_lea.sflag [#allocation3], 1
    %9 = vsyncpa %s8, 0
    %10 = vsyncpa [#allocation4], 0
    %s11 = scalar_lea.sflag [#allocation4], 1
    %12 = vsyncpa %s11, 0
    loop: start=0, step=1, limit=4
    $region2: #{tpu_custom_call.1} parent=1 // loop_pre_header
      _
    $region3: #{tpu_custom_call.1} parent=1 // loop_header
      %s14 = sphi 0, %s18
      %p15 = scmp.ge.s32.totalorder %s14, 4
      %s21 = sphi 0, %s33
      %s22 = sphi 0, %s29
      %s23 = sphi 0, %s21
      %s24 = sphi 0, %s22
      %s25 = sphi 0, %s23
      %s26 = sphi 0, %s24
      %s38 = sphi 0, %s40
      %s41 = sphi 0, %s38
      %s42 = sphi 0, %s41
      %s58 = sphi 0, %s42
      %s62 = sphi 0, %s62
      %s64 = sphi 0, %s62
      %s65 = sphi 0, %s64
      %s79 = sphi 0, %s65
      %s87 = sphi 0, %s89
      %s90 = sphi 0, %s87
      %s91 = sphi 0, %s90
      %s107 = sphi 0, %s91
    $region4: #{tpu_custom_call.1} parent=1 // loop_header_branch
      %17 = sbr.rel (%p15) target = $region8
    $region5: #{tpu_custom_call.1} parent=1 // loop_body
      %s19 = ssub.s32 %s14, 1
      %s20 = ssub.s32 %s14, 2
      %s27 = sadd.s32 1, %s22
      %p28 = scmp.ge.s32.totalorder %s27, 1
      %s29 = scalar_select %p28, 0, %s27
      %s30 = sadd.s32 1, %s21
      %s31 = scalar_select %p28, %s30, %s21
      %p32 = scmp.ge.s32.totalorder %s31, 2
      %s33 = scalar_select %p32, 0, %s31
      %s34 = ssub.s32 %s21, %s33
      %s35 = ssub.s32 %s22, %s29
      %s36 = sor.u32 %s34, %s35
      %p37 = scmp.eq.s32.totalorder %s36, 0
      %s39 = sadd.s32 %s38, 1
      %s40 = scalar_select %p37, %s38, %s39
      %p43 = pneg %p37
      %p44 = scmp.eq.s32.totalorder %s14, 1
      %p45 = por %p43, %p44
      %p46 = scmp.ne.s32.totalorder %s38, %s41
      %p47 = scmp.eq.s32.totalorder %s14, 0
      %p48 = por %p46, %p47
      %p49 = scmp.ne.s32.totalorder %s38, %s41
      %p50 = scmp.eq.s32.totalorder %s19, 1
      %p51 = por %p49, %p50
      %p52 = scmp.ne.s32.totalorder %s41, %s42
      %p53 = scmp.eq.s32.totalorder %s19, 0
      %p54 = por %p52, %p53
      %p55 = scmp.ne.s32.totalorder %s41, %s42
      %p56 = scmp.eq.s32.totalorder %s20, 1
      %p57 = por %p55, %p56
      %p59 = scmp.ne.s32.totalorder %s42, %s58
      %p60 = scmp.eq.s32.totalorder %s20, 0
      %p61 = por %p59, %p60
      %s63 = sadd.s32 %s62, 1
      %p66 = scmp.eq.s32.totalorder %s14, 1
      %p67 = scmp.ne.s32.totalorder %s62, %s64
      %p68 = scmp.eq.s32.totalorder %s14, 0
      %p69 = por %p67, %p68
      %p70 = scmp.ne.s32.totalorder %s62, %s64
      %p71 = scmp.eq.s32.totalorder %s19, 1
      %p72 = por %p70, %p71
      %p73 = scmp.ne.s32.totalorder %s64, %s65
      %p74 = scmp.eq.s32.totalorder %s19, 0
      %p75 = por %p73, %p74
      %p76 = scmp.ne.s32.totalorder %s64, %s65
      %p77 = scmp.eq.s32.totalorder %s20, 1
      %p78 = por %p76, %p77
      %p80 = scmp.ne.s32.totalorder %s65, %s79
      %p81 = scmp.eq.s32.totalorder %s20, 0
      %p82 = por %p80, %p81
      %s83 = ssub.s32 %s21, %s33
      %s84 = ssub.s32 %s22, %s29
      %s85 = sor.u32 %s83, %s84
      %p86 = scmp.eq.s32.totalorder %s85, 0
      %s88 = sadd.s32 %s87, 1
      %s89 = scalar_select %p86, %s87, %s88
      %p92 = pneg %p86
      %p93 = scmp.eq.s32.totalorder %s14, 1
      %p94 = por %p92, %p93
      %p95 = scmp.ne.s32.totalorder %s87, %s90
      %p96 = scmp.eq.s32.totalorder %s14, 0
      %p97 = por %p95, %p96
      %p98 = scmp.ne.s32.totalorder %s87, %s90
      %p99 = scmp.eq.s32.totalorder %s19, 1
      %p100 = por %p98, %p99
      %p101 = scmp.ne.s32.totalorder %s90, %s91
      %p102 = scmp.eq.s32.totalorder %s19, 0
      %p103 = por %p101, %p102
      %p104 = scmp.ne.s32.totalorder %s90, %s91
      %p105 = scmp.eq.s32.totalorder %s20, 1
      %p106 = por %p104, %p105
      %p108 = scmp.ne.s32.totalorder %s91, %s107
      %p109 = scmp.eq.s32.totalorder %s20, 0
      %p110 = por %p108, %p109
      %p111 = scmp.le.s32.totalorder 1, %s14
      %p112 = scmp.lt.s32.totalorder %s14, 3
      %p113 = pnand %p111, %p112
      %p114 = pneg %p113
      // Predicated region
      $region9: #{tpu_custom_call.1} parent=5 // pred_check
        _
      $region10: #{tpu_custom_call.1} parent=5 // pred_check_branch
        %116 = sbr.rel (%p113) target = $region12
      $region11: #{tpu_custom_call.1} parent=5 // pred_region
        %s117 = ssub.s32 %s14, 1
        // Predicated region
        $region13: #{tpu_custom_call.1} parent=11 // pred_check
          %p118 = pneg %p75
        $region14: #{tpu_custom_call.1} parent=11 // pred_check_branch
          %120 = sbr.rel (%p118) target = $region16
        $region15: #{tpu_custom_call.1} parent=11 // pred_region
          _
        $region16: #{tpu_custom_call.1} parent=11 // pred_fallthru
          _
      $region12: #{tpu_custom_call.1} parent=5 // pred_fallthru
        _
      %p121 = scmp.lt.s32.totalorder %s14, 2
      // Predicated region
      $region17: #{tpu_custom_call.1} parent=5 // pred_check
        %p122 = pneg %p121
      $region18: #{tpu_custom_call.1} parent=5 // pred_check_branch
        %124 = sbr.rel (%p122) target = $region20
      $region19: #{tpu_custom_call.1} parent=5 // pred_region
        // Predicated region
        $region21: #{tpu_custom_call.1} parent=19 // pred_check
          %p125 = pneg %p48
        $region22: #{tpu_custom_call.1} parent=19 // pred_check_branch
          %127 = sbr.rel (%p125) target = $region24
        $region23: #{tpu_custom_call.1} parent=19 // pred_region
          %s128 = sand.u32 %s38, 1
          %s129 = scalar_lea.sflag [#allocation3], %s128
          %s130 = sand.u32 %s38, 1
          %s131 = smul.addr %s130, 8
          %s132 = scalar_lea.vmem [#allocation2], %s131
          %s133 = smul.u32 2, %s22
          %s135 = ssub.s32 128, 128
          %136 = vsyncadd %s129, %s135
          %s137 = smul.addr %s21, 2
          %s138 = sadd.s32 %s133, %s137
          %s139 = smul.addr %s138, 64
          %s140 = scalar_lea.hbm %s0, %s139
          %s142 = sshll.u32 %s132, 4
          %s143 = int_to_ptr.vmem [resolvable:$true] %s142
          %145 = dma.hbm_to_vmem [thread:$0]  %s140, 128, %s143, %s129
        $region24: #{tpu_custom_call.1} parent=19 // pred_fallthru
          _
      $region20: #{tpu_custom_call.1} parent=5 // pred_fallthru
        _
      %p146 = scmp.le.s32.totalorder 1, %s14
      %p147 = scmp.lt.s32.totalorder %s14, 3
      %p148 = pnand %p146, %p147
      %p149 = pneg %p148
      // Predicated region
      $region25: #{tpu_custom_call.1} parent=5 // pred_check
        _
      $region26: #{tpu_custom_call.1} parent=5 // pred_check_branch
        %151 = sbr.rel (%p148) target = $region28
      $region27: #{tpu_custom_call.1} parent=5 // pred_region
        %s152 = ssub.s32 %s14, 1
        %s153 = sand.u32 %s41, 1
        %s154 = scalar_lea.sflag [#allocation3], %s153
        %s155 = sand.u32 %s41, 1
        %s156 = smul.addr %s155, 8
        %s157 = scalar_lea.vmem [#allocation2], %s156
        // Predicated region
        $region29: #{tpu_custom_call.1} parent=27 // pred_check
          %p158 = pneg %p54
        $region30: #{tpu_custom_call.1} parent=27 // pred_check_branch
          %160 = sbr.rel (%p158) target = $region32
        $region31: #{tpu_custom_call.1} parent=27 // pred_region
          %161 = dma.done %s154, 128
        $region32: #{tpu_custom_call.1} parent=27 // pred_fallthru
          _
        %s162 = sand.u32 %s41, 1
        %s163 = scalar_lea.sflag [#allocation3], %s162
        %s164 = sand.u32 %s41, 1
        %s165 = smul.addr %s164, 8
        %s166 = scalar_lea.vmem [#allocation2], %s165
        %p167 = pneg %p54
        %p168 = pneg %p51
        %p169 = pneg %p75
        %p170 = pneg %p72
        %p171 = pneg %p103
        %p172 = pneg %p100
        %s173 = sand.u32 %s90, 1
        %s174 = scalar_lea.sflag [#allocation4], %s173
        %s175 = sand.u32 %s90, 1
        %s176 = smul.addr %s175, 8
        %s177 = scalar_lea.vmem [#allocation5], %s176
        %s178 = smul.u32 2, %s24
        %s179 = smul.u32 2, %s24
        %v180 = vld [vmem:[%s157] sm:$0xff]
        %v182 = vcombine.high %v180, %v180
        %vm184 = vcmask 1043456
        %v185 = vsel %vm184, %v180, 0.0
        %v186 = vrot.slane %v185, 4
        %v187 = vadd.f32 %v185, %v186
        %v188 = vrot.slane %v187, 2
        %v189 = vadd.f32 %v187, %v188
        %v190 = vrot.slane %v189, 1
        %v191 = vadd.f32 %v189, %v190
        %v192 = vsel %vm184, %v182, 0.0
        %v193 = vrot.slane %v192, 4
        %v194 = vadd.f32 %v192, %v193
        %v195 = vrot.slane %v194, 2
        %v196 = vadd.f32 %v194, %v195
        %v197 = vrot.slane %v196, 1
        %v198 = vadd.f32 %v196, %v197
        %v199 = vrcp.pop 4.0
        %v200 = vmul.f32 %v191, %v199
        %v201 = vmul.f32 %v198, %v199
        %v204 = vcombine.low %v200, %v201
        %v206 = vsub.f32 %v180, %v204
        %v207 = vmul.f32 %v206, %v206
        %v209 = vcombine.high %v207, %v207
        %v211 = vsel %vm184, %v207, 0.0
        %v212 = vrot.slane %v211, 4
        %v213 = vadd.f32 %v211, %v212
        %v214 = vrot.slane %v213, 2
        %v215 = vadd.f32 %v213, %v214
        %v216 = vrot.slane %v215, 1
        %v217 = vadd.f32 %v215, %v216
        %v218 = vsel %vm184, %v209, 0.0
        %v219 = vrot.slane %v218, 4
        %v220 = vadd.f32 %v218, %v219
        %v221 = vrot.slane %v220, 2
        %v222 = vadd.f32 %v220, %v221
        %v223 = vrot.slane %v222, 1
        %v224 = vadd.f32 %v222, %v223
        %v225 = vmul.f32 %v217, %v199
        %v226 = vmul.f32 %v224, %v199
        %v227 = vadd.f32 %v225, 1e-05
        %v228 = vadd.f32 %v226, 1e-05
        %v229 = vrsqrt.pop %v227
        %v230 = vrsqrt.pop %v228
        %v233 = vcombine.low %v229, %v230
        %v235 = vmul.f32 %v206, %v233
        %v236 = vld [vmem:[%s1] sm:$0xf]
        %238 = vset.pattern.permute.xlu0 0
        %239 = vperm.xlu0 %238, %v236
        %v240 = vpop.permute.xlu0 %239
        %v242 = vunpack.c.l.s4 839922192
        %v243 = vunpack.c.0.s8 %v242
        %v244 = vlaneseq
        %v245 = vshrl.u32 %v244, 7
        %v246 = vsub.s32 %v243, %v245
        %v247 = vrot.slane %v240, %v246
        %v249 = vmul.f32 %v235, %v247
        %250 = vst [vmem:[%s177] sm:$0xff] %v249
        %s251 = sand.u32 %s90, 1
        %s252 = scalar_lea.sflag [#allocation4], %s251
        %s253 = sand.u32 %s90, 1
        %s254 = smul.addr %s253, 8
        %s255 = scalar_lea.vmem [#allocation5], %s254
        // Predicated region
        $region33: #{tpu_custom_call.1} parent=27 // pred_check
          %p256 = pneg %p100
        $region34: #{tpu_custom_call.1} parent=27 // pred_check_branch
          %258 = sbr.rel (%p256) target = $region36
        $region35: #{tpu_custom_call.1} parent=27 // pred_region
          %s259 = smul.u32 2, %s24
          %s261 = ssub.s32 128, 128
          %262 = vsyncadd %s252, %s261
          %s263 = smul.addr %s23, 2
          %s264 = sadd.s32 %s259, %s263
          %s265 = smul.addr %s264, 64
          %s266 = scalar_lea.hbm %s2, %s265
          %s268 = sshll.u32 %s255, 4
          %s269 = int_to_ptr.vmem [resolvable:$true] %s268
          %271 = dma.vmem_to_hbm [thread:$0]  %s269, 128, %s266, %s252
        $region36: #{tpu_custom_call.1} parent=27 // pred_fallthru
          _
      $region28: #{tpu_custom_call.1} parent=5 // pred_fallthru
        _
      %p272 = scmp.le.s32.totalorder 2, %s14
      // Predicated region
      $region37: #{tpu_custom_call.1} parent=5 // pred_check
        %p273 = pneg %p272
      $region38: #{tpu_custom_call.1} parent=5 // pred_check_branch
        %275 = sbr.rel (%p273) target = $region40
      $region39: #{tpu_custom_call.1} parent=5 // pred_region
        %s276 = ssub.s32 %s14, 2
        // Predicated region
        $region41: #{tpu_custom_call.1} parent=39 // pred_check
          %p277 = pneg %p106
        $region42: #{tpu_custom_call.1} parent=39 // pred_check_branch
          %279 = sbr.rel (%p277) target = $region44
        $region43: #{tpu_custom_call.1} parent=39 // pred_region
          %s280 = sand.u32 %s91, 1
          %s281 = scalar_lea.sflag [#allocation4], %s280
          %s282 = sand.u32 %s91, 1
          %s283 = smul.addr %s282, 8
          %s284 = scalar_lea.vmem [#allocation5], %s283
          %285 = dma.done %s281, 128
        $region44: #{tpu_custom_call.1} parent=39 // pred_fallthru
          _
      $region40: #{tpu_custom_call.1} parent=5 // pred_fallthru
        _
    $region6: #{tpu_custom_call.1} parent=1 // loop_footer
      %s18 = sadd.s32 1, %s14
    $region7: #{tpu_custom_call.1} parent=1 // loop_footer_branch
      %13 = sbr.rel target = $region3
    $region8: #{tpu_custom_call.1} parent=1 // loop_exit
      _
    %286 = vsyncpa [#allocation3], 1
    %s287 = scalar_lea.sflag [#allocation3], 1
    %288 = vsyncpa %s287, 1
    %289 = vsyncpa [#allocation4], 1
    %s290 = scalar_lea.sflag [#allocation4], 1
    %291 = vsyncpa %s290, 1

</llo_original>
